<compile_context>
chip_gen: v5e
topology: v5e:2x2
jax: 0.10.0
libtpu: 0.0.40
codegen_flags: <defaults>
</compile_context>

<pallas_src>
import functools

import jax
import jax.numpy as jnp
from jax.experimental import pallas as pl
from jax.experimental.pallas import tpu as pltpu

LN_EPS = 1e-5


def _round_up(x, m):
    return (x + m - 1) // m * m


def _ffn_kernel(x_ref, gamma_ref, beta_ref, w1_ref, b1_ref, w2_ref, b2_ref,
                o_ref, *, d_model):
    # x_ref: (tm, Dp) tile of tokens (Dp = d_model padded to a multiple of 128;
    # padded lanes / padded rows are zero).
    x = x_ref[...].astype(jnp.float32)
    dp = x.shape[-1]
    inv_d = 1.0 / d_model

    # --- LayerNorm over the real d_model lanes (padded lanes of x are 0) ---
    mean = jnp.sum(x, axis=-1, keepdims=True) * inv_d
    if dp != d_model:
        lane = jax.lax.broadcasted_iota(jnp.int32, (1, dp), 1)
        centered = jnp.where(lane < d_model, x - mean, 0.0)
    else:
        centered = x - mean
    var = jnp.sum(centered * centered, axis=-1, keepdims=True) * inv_d
    xn = centered * jax.lax.rsqrt(var + LN_EPS)
    xn = xn * gamma_ref[...] + beta_ref[...]   # padded gamma/beta are 0 -> xn pad = 0

    # --- fc1 -> ReLU (dropout = identity in eval); bf16 into the MXU ---
    h = jnp.dot(xn.astype(jnp.bfloat16), w1_ref[...],
                preferred_element_type=jnp.float32) + b1_ref[...]
    h = jnp.maximum(h, 0.0).astype(jnp.bfloat16)

    # --- fc2 (dropout = identity in eval) + residual, write straight to o_ref ---
    y = jnp.dot(h, w2_ref[...], preferred_element_type=jnp.float32) + b2_ref[...]
    o_ref[...] = (y + x).astype(o_ref.dtype)


def _build_call(kernel, out_dtype, Np, Dp, Dip, tm, vmem_limit, single_buffer_weights):
    if single_buffer_weights:
        const_spec = lambda shape: pl.BlockSpec(  # noqa: E731
            shape, lambda i: (0, 0), pipeline_mode=pl.Buffered(1))
    else:
        const_spec = lambda shape: pl.BlockSpec(shape, lambda i: (0, 0))  # noqa: E731

    return pl.pallas_call(
        kernel,
        out_shape=jax.ShapeDtypeStruct((Np, Dp), out_dtype),
        grid_spec=pltpu.PrefetchScalarGridSpec(
            num_scalar_prefetch=0,
            grid=(Np // tm,),
            in_specs=[
                pl.BlockSpec((tm, Dp), lambda i: (i, 0)),   # x tile
                const_spec((1, Dp)),                        # gamma
                const_spec((1, Dp)),                        # beta
                const_spec((Dp, Dip)),                      # W1 (bf16)
                const_spec((1, Dip)),                       # b1
                const_spec((Dip, Dp)),                      # W2 (bf16)
                const_spec((1, Dp)),                        # b2
            ],
            out_specs=pl.BlockSpec((tm, Dp), lambda i: (i, 0)),
        ),
        compiler_params=pltpu.CompilerParams(
            dimension_semantics=("parallel",),
            vmem_limit_bytes=vmem_limit,
        ),
        input_output_aliases={0: 0},   # shape-preserving: reuse the x buffer
    )


def position_wise_fc(sequences, gamma, beta, w1, b1, w2, b2, *, tm=None):
    """sequences: (batch, seq_len, d_model). Returns same shape/dtype."""
    B, S, D = sequences.shape
    Di = w1.shape[1]
    N = B * S
    orig_dtype = sequences.dtype

    # Lane-dense padding of the feature axes.
    Dp = _round_up(D, 128)
    Dip = _round_up(Di, 128)

    # Fixed row tile: multiple of 8 (sublane); 256 for large token counts so the
    # grid has many parallel steps (pipelining, both v7x TensorCores busy).
    if tm is None:
        tm = 256 if N >= 256 else _round_up(N, 8)
    Np = _round_up(N, tm)

    x2d = sequences.reshape(N, D)
    x2d = jnp.pad(x2d, ((0, Np - N), (0, Dp - D)))

    gamma2 = jnp.pad(gamma.astype(jnp.float32).reshape(1, D), ((0, 0), (0, Dp - D)))
    beta2 = jnp.pad(beta.astype(jnp.float32).reshape(1, D), ((0, 0), (0, Dp - D)))
    b1_2 = jnp.pad(b1.astype(jnp.float32).reshape(1, Di), ((0, 0), (0, Dip - Di)))
    b2_2 = jnp.pad(b2.astype(jnp.float32).reshape(1, D), ((0, 0), (0, Dp - D)))
    w1p = jnp.pad(w1, ((0, Dp - D), (0, Dip - Di))).astype(jnp.bfloat16)
    w2p = jnp.pad(w2, ((0, Dip - Di), (0, Dp - D))).astype(jnp.bfloat16)

    # Explicit VMEM budget: double-buffered x/out tiles + single-buffered bf16
    # weights + f32 intermediate slabs, with 2x headroom, capped at 64 MiB
    # (physical VMEM on v7x).
    xbytes = jnp.dtype(orig_dtype).itemsize
    est = (
        2 * tm * Dp * xbytes          # x tiles (double-buffered)
        + 2 * tm * Dp * xbytes        # out tiles (double-buffered)
        + 2 * (Dp * Dip + Dip * Dp)   # W1 + W2 in bf16
        + tm * Dip * 4                # h (f32)
        + 3 * tm * Dp * 4             # x / xn / y f32 slabs
    )
    vmem_limit = int(min(64 * 1024 * 1024, max(16 * 1024 * 1024, 2 * est)))

    kernel = functools.partial(_ffn_kernel, d_model=D)
    operands = (x2d, gamma2, beta2, w1p, b1_2, w2p, b2_2)

    # TODO(synk): for configs where W1+W2 exceed VMEM (e.g. >~48 MiB bf16 on v7x)
    # add a second ("arbitrary") grid axis chunking d_inner with a (tm, Dp) f32
    # accumulator scratch finalized via pl.when on the last chunk.
    try:
        out2d = _build_call(kernel, orig_dtype, Np, Dp, Dip, tm, vmem_limit,
                            single_buffer_weights=True)(*operands)
    except Exception:
        # Fallback if this jax build rejects pl.Buffered(1) for pallas_call specs.
        out2d = _build_call(kernel, orig_dtype, Np, Dp, Dip, tm, vmem_limit,
                            single_buffer_weights=False)(*operands)

    return out2d[:N, :D].reshape(B, S, D)


def _reference(sequences, gamma, beta, w1, b1, w2, b2):
    x = sequences.astype(jnp.float32)
    mean = jnp.mean(x, axis=-1, keepdims=True)
    var = jnp.mean((x - mean) ** 2, axis=-1, keepdims=True)
    xn = (x - mean) / jnp.sqrt(var + LN_EPS) * gamma + beta
    h = jnp.maximum(xn @ w1 + b1, 0.0)
    y = h @ w2 + b2
    return (y + x).astype(sequences.dtype)


if __name__ == "__main__":
    d_model, d_inner = 32, 64
    batch, seq = 2, 8

    key = jax.random.PRNGKey(0)
    kx, k1, k2, kb1, kb2 = jax.random.split(key, 5)

    sequences = jax.random.normal(kx, (batch, seq, d_model), dtype=jnp.float32)

    # Deterministic parameter init (PyTorch-like uniform bounds).
    gamma = jnp.ones((d_model,), jnp.float32)
    beta = jnp.zeros((d_model,), jnp.float32)
    lim1 = 1.0 / (d_model ** 0.5)
    lim2 = 1.0 / (d_inner ** 0.5)
    w1 = jax.random.uniform(k1, (d_model, d_inner), jnp.float32, -lim1, lim1)
    b1 = jax.random.uniform(kb1, (d_inner,), jnp.float32, -lim1, lim1)
    w2 = jax.random.uniform(k2, (d_inner, d_model), jnp.float32, -lim2, lim2)
    b2 = jax.random.uniform(kb2, (d_model,), jnp.float32, -lim2, lim2)

    out = position_wise_fc(sequences, gamma, beta, w1, b1, w2, b2)
    out = jax.block_until_ready(out)

    ref = _reference(sequences, gamma, beta, w1, b1, w2, b2)
    assert out.shape == sequences.shape
    # bf16 MXU inputs with f32 accumulation -> allow small deviation vs f32 ref.
    max_err = float(jnp.max(jnp.abs(out - ref)))
    assert jnp.allclose(out, ref, atol=5e-2, rtol=5e-2), f"mismatch vs reference (max |err|={max_err})"

    # TODO(synk): dropout is implemented as identity (inference mode); stochastic
    # training-mode dropout would use pltpu.prng_seed / pltpu.stateful_bernoulli.
    print("KERNEL_OK")
</pallas_src>

<mosaic_0001>
module attributes {stable_mosaic.version = 11 : i64} {
  func.func @_ffn_kernel(%arg0: i32, %arg1: memref<16x128xf32, #tpu.memory_space<vmem>>, %arg2: memref<1x128xf32, #tpu.memory_space<vmem>>, %arg3: memref<1x128xf32, #tpu.memory_space<vmem>>, %arg4: memref<128x128xbf16, #tpu.memory_space<vmem>>, %arg5: memref<1x128xf32, #tpu.memory_space<vmem>>, %arg6: memref<128x128xbf16, #tpu.memory_space<vmem>>, %arg7: memref<1x128xf32, #tpu.memory_space<vmem>>, %arg8: memref<16x128xf32, #tpu.memory_space<vmem>>) attributes {dimension_semantics = [#tpu.dimension_semantics<parallel>], iteration_bounds = array<i64: 1>, scalar_prefetch = 0 : i64, scratch_operands = 0 : i64, tpu.core_type = #tpu.core_type<tc>, window_params = [{transform_indices = @transform_0, window_bounds = array<i64: 16, 128>}, {pipeline_mode = #tpu.pipeline_mode<synchronous>, transform_indices = @transform_1, window_bounds = array<i64: 1, 128>}, {pipeline_mode = #tpu.pipeline_mode<synchronous>, transform_indices = @transform_2, window_bounds = array<i64: 1, 128>}, {pipeline_mode = #tpu.pipeline_mode<synchronous>, transform_indices = @transform_3, window_bounds = array<i64: 128, 128>}, {pipeline_mode = #tpu.pipeline_mode<synchronous>, transform_indices = @transform_4, window_bounds = array<i64: 1, 128>}, {pipeline_mode = #tpu.pipeline_mode<synchronous>, transform_indices = @transform_5, window_bounds = array<i64: 128, 128>}, {pipeline_mode = #tpu.pipeline_mode<synchronous>, transform_indices = @transform_6, window_bounds = array<i64: 1, 128>}, {transform_indices = @transform_7, window_bounds = array<i64: 16, 128>}]} {
    %c0 = arith.constant 0 : index
    %c0_0 = arith.constant 0 : index
    %0 = vector.load %arg1[%c0, %c0_0] : memref<16x128xf32, #tpu.memory_space<vmem>>, vector<16x128xf32>
    %cst = arith.constant dense<0.000000e+00> : vector<16xf32>
    %1 = vector.multi_reduction <add>, %0, %cst [1] : vector<16x128xf32> to vector<16xf32>
    %2 = vector.shape_cast %1 : vector<16xf32> to vector<16x1xf32>
    %cst_1 = arith.constant 3.125000e-02 : f32
    %3 = vector.broadcast %cst_1 : f32 to vector<16x1xf32>
    %4 = arith.mulf %2, %3 : vector<16x1xf32>
    %5 = tpu.iota {dimensions = array<i32: 1>} : vector<1x128xi32>
    %c32_i32 = arith.constant 32 : i32
    %6 = vector.broadcast %c32_i32 : i32 to vector<1x128xi32>
    %7 = arith.cmpi slt, %5, %6 : vector<1x128xi32>
    %8 = vector.broadcast %4 : vector<16x1xf32> to vector<16x128xf32>
    %9 = arith.subf %0, %8 : vector<16x128xf32>
    %cst_2 = arith.constant 0.000000e+00 : f32
    %10 = vector.shape_cast %7 : vector<1x128xi1> to vector<1x128xi1>
    %11 = vector.broadcast %10 : vector<1x128xi1> to vector<16x128xi1>
    %12 = vector.broadcast %cst_2 : f32 to vector<16x128xf32>
    %13 = arith.select %11, %9, %12 : vector<16x128xi1>, vector<16x128xf32>
    %14 = arith.mulf %13, %13 : vector<16x128xf32>
    %cst_3 = arith.constant dense<0.000000e+00> : vector<16xf32>
    %15 = vector.multi_reduction <add>, %14, %cst_3 [1] : vector<16x128xf32> to vector<16xf32>
    %16 = vector.shape_cast %15 : vector<16xf32> to vector<16x1xf32>
    %cst_4 = arith.constant 3.125000e-02 : f32
    %17 = vector.broadcast %cst_4 : f32 to vector<16x1xf32>
    %18 = arith.mulf %16, %17 : vector<16x1xf32>
    %cst_5 = arith.constant 9.99999974E-6 : f32
    %19 = vector.broadcast %cst_5 : f32 to vector<16x1xf32>
    %20 = arith.addf %18, %19 : vector<16x1xf32>
    %21 = math.rsqrt %20 : vector<16x1xf32>
    %22 = vector.broadcast %21 : vector<16x1xf32> to vector<16x128xf32>
    %23 = arith.mulf %13, %22 : vector<16x128xf32>
    %c0_6 = arith.constant 0 : index
    %c0_7 = arith.constant 0 : index
    %24 = vector.load %arg2[%c0_6, %c0_7] : memref<1x128xf32, #tpu.memory_space<vmem>>, vector<1x128xf32>
    %25 = vector.broadcast %24 : vector<1x128xf32> to vector<16x128xf32>
    %26 = arith.mulf %23, %25 : vector<16x128xf32>
    %c0_8 = arith.constant 0 : index
    %c0_9 = arith.constant 0 : index
    %27 = vector.load %arg3[%c0_8, %c0_9] : memref<1x128xf32, #tpu.memory_space<vmem>>, vector<1x128xf32>
    %28 = vector.broadcast %27 : vector<1x128xf32> to vector<16x128xf32>
    %29 = arith.addf %26, %28 : vector<16x128xf32>
    %30 = arith.truncf %29 : vector<16x128xf32> to vector<16x128xbf16>
    %c0_10 = arith.constant 0 : index
    %c0_11 = arith.constant 0 : index
    %31 = vector.load %arg4[%c0_10, %c0_11] : memref<128x128xbf16, #tpu.memory_space<vmem>>, vector<128x128xbf16>
    %cst_12 = arith.constant dense<0.000000e+00> : vector<16x128xf32>
    %32 = tpu.matmul %30, %31, %cst_12 {dimension_numbers = #tpu.dot_dimension_numbers<[1], [0], [0], [1], [0, 0, 1, 1], [], []>} : vector<16x128xbf16>, vector<128x128xbf16>, vector<16x128xf32> -> vector<16x128xf32>
    %c0_13 = arith.constant 0 : index
    %c0_14 = arith.constant 0 : index
    %33 = vector.load %arg5[%c0_13, %c0_14] : memref<1x128xf32, #tpu.memory_space<vmem>>, vector<1x128xf32>
    %34 = vector.broadcast %33 : vector<1x128xf32> to vector<16x128xf32>
    %35 = arith.addf %32, %34 : vector<16x128xf32>
    %cst_15 = arith.constant 0.000000e+00 : f32
    %36 = vector.broadcast %cst_15 : f32 to vector<16x128xf32>
    %37 = arith.maximumf %35, %36 : vector<16x128xf32>
    %38 = arith.truncf %37 : vector<16x128xf32> to vector<16x128xbf16>
    %c0_16 = arith.constant 0 : index
    %c0_17 = arith.constant 0 : index
    %39 = vector.load %arg6[%c0_16, %c0_17] : memref<128x128xbf16, #tpu.memory_space<vmem>>, vector<128x128xbf16>
    %cst_18 = arith.constant dense<0.000000e+00> : vector<16x128xf32>
    %40 = tpu.matmul %38, %39, %cst_18 {dimension_numbers = #tpu.dot_dimension_numbers<[1], [0], [0], [1], [0, 0, 1, 1], [], []>} : vector<16x128xbf16>, vector<128x128xbf16>, vector<16x128xf32> -> vector<16x128xf32>
    %c0_19 = arith.constant 0 : index
    %c0_20 = arith.constant 0 : index
    %41 = vector.load %arg7[%c0_19, %c0_20] : memref<1x128xf32, #tpu.memory_space<vmem>>, vector<1x128xf32>
    %42 = vector.broadcast %41 : vector<1x128xf32> to vector<16x128xf32>
    %43 = arith.addf %40, %42 : vector<16x128xf32>
    %44 = arith.addf %43, %0 : vector<16x128xf32>
    %c0_21 = arith.constant 0 : index
    %c0_22 = arith.constant 0 : index
    %45 = vector.load %arg8[%c0_21, %c0_22] : memref<16x128xf32, #tpu.memory_space<vmem>>, vector<16x128xf32>
    tpu.vector_store %arg8[%c0_21, %c0_22], %44 {strides = array<i32>} : memref<16x128xf32, #tpu.memory_space<vmem>>, vector<16x128xf32>,
    return
  }
  func.func @transform_0(%arg0: i32) -> (i32, i32) {
    %c0_i32 = arith.constant 0 : i32
    %c0_i32_0 = arith.constant 0 : i32
    return %arg0, %c0_i32 : i32, i32
  }
  func.func @transform_1(%arg0: i32) -> (i32, i32) {
    %c0_i32 = arith.constant 0 : i32
    %c0_i32_0 = arith.constant 0 : i32
    %c0_i32_1 = arith.constant 0 : i32
    return %c0_i32, %c0_i32_0 : i32, i32
  }
  func.func @transform_2(%arg0: i32) -> (i32, i32) {
    %c0_i32 = arith.constant 0 : i32
    %c0_i32_0 = arith.constant 0 : i32
    %c0_i32_1 = arith.constant 0 : i32
    return %c0_i32, %c0_i32_0 : i32, i32
  }
  func.func @transform_3(%arg0: i32) -> (i32, i32) {
    %c0_i32 = arith.constant 0 : i32
    %c0_i32_0 = arith.constant 0 : i32
    %c0_i32_1 = arith.constant 0 : i32
    return %c0_i32, %c0_i32_0 : i32, i32
  }
  func.func @transform_4(%arg0: i32) -> (i32, i32) {
    %c0_i32 = arith.constant 0 : i32
    %c0_i32_0 = arith.constant 0 : i32
    %c0_i32_1 = arith.constant 0 : i32
    return %c0_i32, %c0_i32_0 : i32, i32
  }
  func.func @transform_5(%arg0: i32) -> (i32, i32) {
    %c0_i32 = arith.constant 0 : i32
    %c0_i32_0 = arith.constant 0 : i32
    %c0_i32_1 = arith.constant 0 : i32
    return %c0_i32, %c0_i32_0 : i32, i32
  }
  func.func @transform_6(%arg0: i32) -> (i32, i32) {
    %c0_i32 = arith.constant 0 : i32
    %c0_i32_0 = arith.constant 0 : i32
    %c0_i32_1 = arith.constant 0 : i32
    return %c0_i32, %c0_i32_0 : i32, i32
  }
  func.func @transform_7(%arg0: i32) -> (i32, i32) {
    %c0_i32 = arith.constant 0 : i32
    %c0_i32_0 = arith.constant 0 : i32
    return %arg0, %c0_i32 : i32, i32
  }
}

module attributes {stable_mosaic.version = 11 : i64} {
  func.func @_ffn_kernel(%arg0: i32, %arg1: memref<16x128xf32, #tpu.memory_space<vmem>>, %arg2: memref<1x128xf32, #tpu.memory_space<vmem>>, %arg3: memref<1x128xf32, #tpu.memory_space<vmem>>, %arg4: memref<128x128xbf16, #tpu.memory_space<vmem>>, %arg5: memref<1x128xf32, #tpu.memory_space<vmem>>, %arg6: memref<128x128xbf16, #tpu.memory_space<vmem>>, %arg7: memref<1x128xf32, #tpu.memory_space<vmem>>, %arg8: memref<16x128xf32, #tpu.memory_space<vmem>>) attributes {dimension_semantics = [#tpu.dimension_semantics<parallel>], iteration_bounds = array<i64: 1>, scalar_prefetch = 0 : i64, scratch_operands = 0 : i64, tpu.core_type = #tpu.core_type<tc>, window_params = [{transform_indices = @transform_0, window_bounds = array<i64: 16, 128>}, {pipeline_mode = #tpu.pipeline_mode<synchronous>, transform_indices = @transform_1, window_bounds = array<i64: 1, 128>}, {pipeline_mode = #tpu.pipeline_mode<synchronous>, transform_indices = @transform_2, window_bounds = array<i64: 1, 128>}, {pipeline_mode = #tpu.pipeline_mode<synchronous>, transform_indices = @transform_3, window_bounds = array<i64: 128, 128>}, {pipeline_mode = #tpu.pipeline_mode<synchronous>, transform_indices = @transform_4, window_bounds = array<i64: 1, 128>}, {pipeline_mode = #tpu.pipeline_mode<synchronous>, transform_indices = @transform_5, window_bounds = array<i64: 128, 128>}, {pipeline_mode = #tpu.pipeline_mode<synchronous>, transform_indices = @transform_6, window_bounds = array<i64: 1, 128>}, {transform_indices = @transform_7, window_bounds = array<i64: 16, 128>}]} {
    %c0 = arith.constant 0 : index
    %c0_0 = arith.constant 0 : index
    %0 = vector.load %arg1[%c0, %c0_0] : memref<16x128xf32, #tpu.memory_space<vmem>>, vector<16x128xf32>
    %cst = arith.constant dense<0.000000e+00> : vector<16xf32>
    %1 = vector.multi_reduction <add>, %0, %cst [1] : vector<16x128xf32> to vector<16xf32>
    %2 = vector.shape_cast %1 : vector<16xf32> to vector<16x1xf32>
    %cst_1 = arith.constant 3.125000e-02 : f32
    %3 = vector.broadcast %cst_1 : f32 to vector<16x1xf32>
    %4 = arith.mulf %2, %3 : vector<16x1xf32>
    %5 = tpu.iota {dimensions = array<i32: 1>} : vector<1x128xi32>
    %c32_i32 = arith.constant 32 : i32
    %6 = vector.broadcast %c32_i32 : i32 to vector<1x128xi32>
    %7 = arith.cmpi slt, %5, %6 : vector<1x128xi32>
    %8 = vector.broadcast %4 : vector<16x1xf32> to vector<16x128xf32>
    %9 = arith.subf %0, %8 : vector<16x128xf32>
    %cst_2 = arith.constant 0.000000e+00 : f32
    %10 = vector.shape_cast %7 : vector<1x128xi1> to vector<1x128xi1>
    %11 = vector.broadcast %10 : vector<1x128xi1> to vector<16x128xi1>
    %12 = vector.broadcast %cst_2 : f32 to vector<16x128xf32>
    %13 = arith.select %11, %9, %12 : vector<16x128xi1>, vector<16x128xf32>
    %14 = arith.mulf %13, %13 : vector<16x128xf32>
    %cst_3 = arith.constant dense<0.000000e+00> : vector<16xf32>
    %15 = vector.multi_reduction <add>, %14, %cst_3 [1] : vector<16x128xf32> to vector<16xf32>
    %16 = vector.shape_cast %15 : vector<16xf32> to vector<16x1xf32>
    %cst_4 = arith.constant 3.125000e-02 : f32
    %17 = vector.broadcast %cst_4 : f32 to vector<16x1xf32>
    %18 = arith.mulf %16, %17 : vector<16x1xf32>
    %cst_5 = arith.constant 9.99999974E-6 : f32
    %19 = vector.broadcast %cst_5 : f32 to vector<16x1xf32>
    %20 = arith.addf %18, %19 : vector<16x1xf32>
    %21 = math.rsqrt %20 : vector<16x1xf32>
    %22 = vector.broadcast %21 : vector<16x1xf32> to vector<16x128xf32>
    %23 = arith.mulf %13, %22 : vector<16x128xf32>
    %c0_6 = arith.constant 0 : index
    %c0_7 = arith.constant 0 : index
    %24 = vector.load %arg2[%c0_6, %c0_7] : memref<1x128xf32, #tpu.memory_space<vmem>>, vector<1x128xf32>
    %25 = vector.broadcast %24 : vector<1x128xf32> to vector<16x128xf32>
    %26 = arith.mulf %23, %25 : vector<16x128xf32>
    %c0_8 = arith.constant 0 : index
    %c0_9 = arith.constant 0 : index
    %27 = vector.load %arg3[%c0_8, %c0_9] : memref<1x128xf32, #tpu.memory_space<vmem>>, vector<1x128xf32>
    %28 = vector.broadcast %27 : vector<1x128xf32> to vector<16x128xf32>
    %29 = arith.addf %26, %28 : vector<16x128xf32>
    %30 = arith.truncf %29 : vector<16x128xf32> to vector<16x128xbf16>
    %c0_10 = arith.constant 0 : index
    %c0_11 = arith.constant 0 : index
    %31 = vector.load %arg4[%c0_10, %c0_11] : memref<128x128xbf16, #tpu.memory_space<vmem>>, vector<128x128xbf16>
    %cst_12 = arith.constant dense<0.000000e+00> : vector<16x128xf32>
    %32 = tpu.matmul %30, %31, %cst_12 {dimension_numbers = #tpu.dot_dimension_numbers<[1], [0], [0], [1], [0, 0, 1, 1], [], []>} : vector<16x128xbf16>, vector<128x128xbf16>, vector<16x128xf32> -> vector<16x128xf32>
    %c0_13 = arith.constant 0 : index
    %c0_14 = arith.constant 0 : index
    %33 = vector.load %arg5[%c0_13, %c0_14] : memref<1x128xf32, #tpu.memory_space<vmem>>, vector<1x128xf32>
    %34 = vector.broadcast %33 : vector<1x128xf32> to vector<16x128xf32>
    %35 = arith.addf %32, %34 : vector<16x128xf32>
    %cst_15 = arith.constant 0.000000e+00 : f32
    %36 = vector.broadcast %cst_15 : f32 to vector<16x128xf32>
    %37 = arith.maximumf %35, %36 : vector<16x128xf32>
    %38 = arith.truncf %37 : vector<16x128xf32> to vector<16x128xbf16>
    %c0_16 = arith.constant 0 : index
    %c0_17 = arith.constant 0 : index
    %39 = vector.load %arg6[%c0_16, %c0_17] : memref<128x128xbf16, #tpu.memory_space<vmem>>, vector<128x128xbf16>
    %cst_18 = arith.constant dense<0.000000e+00> : vector<16x128xf32>
    %40 = tpu.matmul %38, %39, %cst_18 {dimension_numbers = #tpu.dot_dimension_numbers<[1], [0], [0], [1], [0, 0, 1, 1], [], []>} : vector<16x128xbf16>, vector<128x128xbf16>, vector<16x128xf32> -> vector<16x128xf32>
    %c0_19 = arith.constant 0 : index
    %c0_20 = arith.constant 0 : index
    %41 = vector.load %arg7[%c0_19, %c0_20] : memref<1x128xf32, #tpu.memory_space<vmem>>, vector<1x128xf32>
    %42 = vector.broadcast %41 : vector<1x128xf32> to vector<16x128xf32>
    %43 = arith.addf %40, %42 : vector<16x128xf32>
    %44 = arith.addf %43, %0 : vector<16x128xf32>
    %c0_21 = arith.constant 0 : index
    %c0_22 = arith.constant 0 : index
    %45 = vector.load %arg8[%c0_21, %c0_22] : memref<16x128xf32, #tpu.memory_space<vmem>>, vector<16x128xf32>
    tpu.vector_store %arg8[%c0_21, %c0_22], %44 {strides = array<i32>} : memref<16x128xf32, #tpu.memory_space<vmem>>, vector<16x128xf32>,
    return
  }
  func.func @transform_0(%arg0: i32) -> (i32, i32) {
    %c0_i32 = arith.constant 0 : i32
    %c0_i32_0 = arith.constant 0 : i32
    return %arg0, %c0_i32 : i32, i32
  }
  func.func @transform_1(%arg0: i32) -> (i32, i32) {
    %c0_i32 = arith.constant 0 : i32
    %c0_i32_0 = arith.constant 0 : i32
    %c0_i32_1 = arith.constant 0 : i32
    return %c0_i32, %c0_i32_0 : i32, i32
  }
  func.func @transform_2(%arg0: i32) -> (i32, i32) {
    %c0_i32 = arith.constant 0 : i32
    %c0_i32_0 = arith.constant 0 : i32
    %c0_i32_1 = arith.constant 0 : i32
    return %c0_i32, %c0_i32_0 : i32, i32
  }
  func.func @transform_3(%arg0: i32) -> (i32, i32) {
    %c0_i32 = arith.constant 0 : i32
    %c0_i32_0 = arith.constant 0 : i32
    %c0_i32_1 = arith.constant 0 : i32
    return %c0_i32, %c0_i32_0 : i32, i32
  }
  func.func @transform_4(%arg0: i32) -> (i32, i32) {
    %c0_i32 = arith.constant 0 : i32
    %c0_i32_0 = arith.constant 0 : i32
    %c0_i32_1 = arith.constant 0 : i32
    return %c0_i32, %c0_i32_0 : i32, i32
  }
  func.func @transform_5(%arg0: i32) -> (i32, i32) {
    %c0_i32 = arith.constant 0 : i32
    %c0_i32_0 = arith.constant 0 : i32
    %c0_i32_1 = arith.constant 0 : i32
    return %c0_i32, %c0_i32_0 : i32, i32
  }
  func.func @transform_6(%arg0: i32) -> (i32, i32) {
    %c0_i32 = arith.constant 0 : i32
    %c0_i32_0 = arith.constant 0 : i32
    %c0_i32_1 = arith.constant 0 : i32
    return %c0_i32, %c0_i32_0 : i32, i32
  }
  func.func @transform_7(%arg0: i32) -> (i32, i32) {
    %c0_i32 = arith.constant 0 : i32
    %c0_i32_0 = arith.constant 0 : i32
    return %arg0, %c0_i32 : i32, i32
  }
}

</mosaic_0001>

<llo_original>
// kernel: tpu_custom_call.1
$region0: #{tpu_custom_call.1}
  #allocation0 [shape = 'u32[]', space=smem, size = 0x4, offset = 0x4, fixed_abs, tag = 'smem constant byte address 0x4 - core index']
  #allocation1 [shape = 'u32[72,128]{1,0:T(1,128)}', space=vmem, size = 0x9000, scoped, tag = 'internal scratch']
  %s0 = inlined_call_operand.hbm [shape: f32[16,128], index: 0, kind: input, shape index: {}, may-alias: {0,7}]
  %s1 = inlined_call_operand.vmem [shape: f32[1,128], index: 1, kind: input, shape index: {}]
  %s2 = inlined_call_operand.vmem [shape: f32[1,128], index: 2, kind: input, shape index: {}]
  %s3 = inlined_call_operand.hbm [shape: bf16[128,128], index: 3, kind: input, shape index: {}]
  %s4 = inlined_call_operand.vmem [shape: f32[1,128], index: 4, kind: input, shape index: {}]
  %s5 = inlined_call_operand.hbm [shape: bf16[128,128], index: 5, kind: input, shape index: {}]
  %s6 = inlined_call_operand.vmem [shape: f32[1,128], index: 6, kind: input, shape index: {}]
  %s7 = inlined_call_operand.hbm [shape: f32[16,128], index: 7, kind: output, shape index: {}, may-alias: {0,7}]
  %s8 = sld [smem:[#allocation0]]
  $region50: #{tpu_custom_call.1} parent=0
    _
  %s10 = ssub.s32 1, %s8
  %s11 = scalar_select 0, %s10, %s8
  $region1: #{tpu_custom_call.1} parent=0
    #allocation2 [shape = 'u8[8192]{0}', space=vmem, size = 0x2000, scoped, tag = 'input window, operand 0, single buffered']
    #allocation3 [shape = 's32[1]{0}', space=sflag, size = 0x4, scoped, tag = 'scoped memory for tpu_custom_call.1']
    #allocation4 [shape = 's32[1]{0}', space=sflag, size = 0x4, scoped, tag = 'scoped memory for tpu_custom_call.1']
    #allocation5 [shape = 'u8[32768]{0}', space=vmem, size = 0x8000, scoped, tag = 'input window, operand 3, single buffered']
    #allocation6 [shape = 's32[1]{0}', space=sflag, size = 0x4, scoped, tag = 'scoped memory for tpu_custom_call.1']
    #allocation7 [shape = 'u8[32768]{0}', space=vmem, size = 0x8000, scoped, tag = 'input window, operand 5, single buffered']
    #allocation8 [shape = 'u8[8192]{0}', space=vmem, size = 0x2000, scoped, tag = 'output window, operand 0, single buffered']
    %12 = vsyncpa [#allocation3], 0
    %13 = vsyncpa [#allocation6], 0
    %14 = vsyncpa [#allocation4], 0
    // Predicated region
    $region2: #{tpu_custom_call.1} parent=1 // pred_check
      _
    $region3: #{tpu_custom_call.1} parent=1 // pred_check_branch
      %16 = sbr.rel (0) target = $region5
    $region4: #{tpu_custom_call.1} parent=1 // pred_region
      %18 = vsyncadd [#allocation3], 0
      %s19 = sshll.u32 %s0, 4
      %s20 = int_to_ptr.hbm [resolvable:$true] %s19
      %s21 = sshll.u32 [#allocation2], 4
      %s22 = int_to_ptr.vmem [resolvable:$true] %s21
      %27 = dma.hbm_to_vmem [thread:$0]  %s20, 256, %s22, [#allocation3], 128, 128, 8
    $region5: #{tpu_custom_call.1} parent=1 // pred_fallthru
      _
    // Predicated region
    $region6: #{tpu_custom_call.1} parent=1 // pred_check
      _
    $region7: #{tpu_custom_call.1} parent=1 // pred_check_branch
      %29 = sbr.rel (0) target = $region9
    $region8: #{tpu_custom_call.1} parent=1 // pred_region
      _
    $region9: #{tpu_custom_call.1} parent=1 // pred_fallthru
      _
    // Predicated region
    $region10: #{tpu_custom_call.1} parent=1 // pred_check
      _
    $region11: #{tpu_custom_call.1} parent=1 // pred_check_branch
      %31 = sbr.rel (0) target = $region13
    $region12: #{tpu_custom_call.1} parent=1 // pred_region
      _
    $region13: #{tpu_custom_call.1} parent=1 // pred_fallthru
      _
    // Predicated region
    $region14: #{tpu_custom_call.1} parent=1 // pred_check
      _
    $region15: #{tpu_custom_call.1} parent=1 // pred_check_branch
      %33 = sbr.rel (0) target = $region17
    $region16: #{tpu_custom_call.1} parent=1 // pred_region
      %35 = vsyncadd [#allocation6], 0
      %s36 = sshll.u32 %s3, 4
      %s37 = int_to_ptr.hbm [resolvable:$true] %s36
      %s38 = sshll.u32 [#allocation5], 4
      %s39 = int_to_ptr.vmem [resolvable:$true] %s38
      %44 = dma.hbm_to_vmem [thread:$0]  %s37, 1024, %s39, [#allocation6], 64, 64, 4
    $region17: #{tpu_custom_call.1} parent=1 // pred_fallthru
      _
    // Predicated region
    $region18: #{tpu_custom_call.1} parent=1 // pred_check
      _
    $region19: #{tpu_custom_call.1} parent=1 // pred_check_branch
      %46 = sbr.rel (0) target = $region21
    $region20: #{tpu_custom_call.1} parent=1 // pred_region
      _
    $region21: #{tpu_custom_call.1} parent=1 // pred_fallthru
      _
    // Predicated region
    $region22: #{tpu_custom_call.1} parent=1 // pred_check
      _
    $region23: #{tpu_custom_call.1} parent=1 // pred_check_branch
      %48 = sbr.rel (0) target = $region25
    $region24: #{tpu_custom_call.1} parent=1 // pred_region
      %50 = vsyncadd [#allocation6], 0
      %s51 = sshll.u32 %s5, 4
      %s52 = int_to_ptr.hbm [resolvable:$true] %s51
      %s53 = sshll.u32 [#allocation7], 4
      %s54 = int_to_ptr.vmem [resolvable:$true] %s53
      %59 = dma.hbm_to_vmem [thread:$0]  %s52, 1024, %s54, [#allocation6], 64, 64, 4
    $region25: #{tpu_custom_call.1} parent=1 // pred_fallthru
      _
    // Predicated region
    $region26: #{tpu_custom_call.1} parent=1 // pred_check
      _
    $region27: #{tpu_custom_call.1} parent=1 // pred_check_branch
      %61 = sbr.rel (0) target = $region29
    $region28: #{tpu_custom_call.1} parent=1 // pred_region
      _
    $region29: #{tpu_custom_call.1} parent=1 // pred_fallthru
      _
    // Predicated region
    $region30: #{tpu_custom_call.1} parent=1 // pred_check
      _
    $region31: #{tpu_custom_call.1} parent=1 // pred_check_branch
      %63 = sbr.rel (0) target = $region33
    $region32: #{tpu_custom_call.1} parent=1 // pred_region
      %65 = dma.done [#allocation3], 256
    $region33: #{tpu_custom_call.1} parent=1 // pred_fallthru
      _
    // Predicated region
    $region34: #{tpu_custom_call.1} parent=1 // pred_check
      _
    $region35: #{tpu_custom_call.1} parent=1 // pred_check_branch
      %67 = sbr.rel (0) target = $region37
    $region36: #{tpu_custom_call.1} parent=1 // pred_region
      %69 = dma.done [#allocation6], 1024
    $region37: #{tpu_custom_call.1} parent=1 // pred_fallthru
      _
    // Predicated region
    $region38: #{tpu_custom_call.1} parent=1 // pred_check
      _
    $region39: #{tpu_custom_call.1} parent=1 // pred_check_branch
      %71 = sbr.rel (0) target = $region41
    $region40: #{tpu_custom_call.1} parent=1 // pred_region
      %73 = dma.done [#allocation6], 1024
    $region41: #{tpu_custom_call.1} parent=1 // pred_fallthru
      _
    %v74 = vld [vmem:[#allocation2] sm:$0xff]
    %v75 = vld [vmem:[#allocation2 + $0x8] sm:$0xff]
    %76 = vadd.xlane.f32.xlu0 %v74
    %v77 = vpop.xlane.xlu0 %76
    %78 = vadd.xlane.f32.xlu0 %v75
    %v79 = vpop.xlane.xlu0 %78
    %v80 = vmul.f32 %v77, 0.03125
    %v81 = vmul.f32 %v79, 0.03125
    %v82 = vlaneseq
    %v83 = vand.u32 %v82, 127
    %vm84 = vcmp.lt.s32.totalorder %v83, 32
    %v85 = vsub.f32 %v74, %v80
    %v86 = vsub.f32 %v75, %v81
    %v87 = vsel %vm84, 1, 0
    %vm88 = vcmp.eq.s32.totalorder %v87, 1
    %v89 = vsel %vm88, %v85, 0.0
    %v90 = vsel %vm88, %v86, 0.0
    %v91 = vmul.f32 %v89, %v89
    %v92 = vmul.f32 %v90, %v90
    %93 = vadd.xlane.f32.xlu0 %v91
    %v94 = vpop.xlane.xlu0 %93
    %95 = vadd.xlane.f32.xlu0 %v92
    %v96 = vpop.xlane.xlu0 %95
    %v97 = vmul.f32 %v94, 0.03125
    %v98 = vmul.f32 %v96, 0.03125
    %v99 = vadd.f32 %v97, 1e-05
    %v100 = vadd.f32 %v98, 1e-05
    %v101 = vrsqrt.pop %v99
    %v102 = vmul.f32 %v101, %v99
    %v103 = vmul.f32 %v102, %v101
    %v104 = vmul.f32 0.5, %v103
    %v105 = vsub.f32 1.5, %v104
    %v106 = vmul.f32 %v101, %v105
    %vm107 = vweird.f32 %v99
    %vm108 = vweird.f32 %v101
    %vm109 = vmor %vm107, %vm108
    %v110 = vsel %vm109, %v101, %v106
    %v111 = vrsqrt.pop %v100
    %v112 = vmul.f32 %v111, %v100
    %v113 = vmul.f32 %v112, %v111
    %v114 = vmul.f32 0.5, %v113
    %v115 = vsub.f32 1.5, %v114
    %v116 = vmul.f32 %v111, %v115
    %vm117 = vweird.f32 %v100
    %vm118 = vweird.f32 %v111
    %vm119 = vmor %vm117, %vm118
    %v120 = vsel %vm119, %v111, %v116
    %v121 = vmul.f32 %v89, %v110
    %v122 = vmul.f32 %v90, %v120
    %v123 = vld [vmem:[%s1] sm:$0x1]
    %v125 = vperm.slane %v123, 0
    %v127 = vmul.f32 %v121, %v125
    %v128 = vmul.f32 %v122, %v125
    %v129 = vld [vmem:[%s2] sm:$0x1]
    %v131 = vperm.slane %v129, 0
    %v133 = vadd.f32 %v127, %v131
    %v134 = vadd.f32 %v128, %v131
    %v135 = vpack.c.bf16 %v134, %v133
    %v136 = vld [vmem:[#allocation5] sm:$0xf]
    %v137 = vld [vmem:[#allocation5 + $0x4] sm:$0xf]
    %v138 = vld [vmem:[#allocation5 + $0x8] sm:$0xf]
    %v139 = vld [vmem:[#allocation5 + $0xc] sm:$0xf]
    %v140 = vld [vmem:[#allocation5 + $0x10] sm:$0xf]
    %v141 = vld [vmem:[#allocation5 + $0x14] sm:$0xf]
    %v142 = vld [vmem:[#allocation5 + $0x18] sm:$0xf]
    %v143 = vld [vmem:[#allocation5 + $0x1c] sm:$0xf]
    %v144 = vld [vmem:[#allocation5 + $0x20] sm:$0xf]
    %v145 = vld [vmem:[#allocation5 + $0x24] sm:$0xf]
    %v146 = vld [vmem:[#allocation5 + $0x28] sm:$0xf]
    %v147 = vld [vmem:[#allocation5 + $0x2c] sm:$0xf]
    %v148 = vld [vmem:[#allocation5 + $0x30] sm:$0xf]
    %v149 = vld [vmem:[#allocation5 + $0x34] sm:$0xf]
    %v150 = vld [vmem:[#allocation5 + $0x38] sm:$0xf]
    %v151 = vld [vmem:[#allocation5 + $0x3c] sm:$0xf]
    %v152 = vld [vmem:[%s4] sm:$0x1]
    %v154 = vperm.slane %v152, 0
    %v172 = vunpack.c.l.b16 %v136
    %v173 = vunpack.c.l.b16 %v137
    %v174 = vunpack.c.l.b16 %v138
    %v175 = vunpack.c.l.b16 %v139
    %v176 = vunpack.c.l.b16 %v140
    %v177 = vunpack.c.l.b16 %v141
    %v178 = vunpack.c.l.b16 %v142
    %v179 = vunpack.c.l.b16 %v143
    %v180 = vunpack.c.l.b16 %v144
    %v181 = vunpack.c.l.b16 %v145
    %v182 = vunpack.c.l.b16 %v146
    %v183 = vunpack.c.l.b16 %v147
    %v184 = vunpack.c.l.b16 %v148
    %v185 = vunpack.c.l.b16 %v149
    %v186 = vunpack.c.l.b16 %v150
    %v187 = vunpack.c.l.b16 %v151
    %v188 = vpack.c.b16 %v173, %v172
    %v189 = vpack.c.b16 %v175, %v174
    %v190 = vpack.c.b16 %v177, %v176
    %v191 = vpack.c.b16 %v179, %v178
    %v192 = vpack.c.b16 %v181, %v180
    %v193 = vpack.c.b16 %v183, %v182
    %v194 = vpack.c.b16 %v185, %v184
    %v195 = vpack.c.b16 %v187, %v186
    %204 = vmatpush.bf16.msra.mxu0 %v195
    %205 = vmatpush.bf16.msra.mxu0 %v194
    %206 = vmatpush.bf16.msra.mxu0 %v193
    %207 = vmatpush.bf16.msra.mxu0 %v192
    %208 = vmatpush.bf16.msra.mxu0 %v191
    %209 = vmatpush.bf16.msra.mxu0 %v190
    %210 = vmatpush.bf16.msra.mxu0 %v189
    %211 = vmatpush.bf16.msra.mxu0 %v188
    %212 = vmatmul.bf16.gmra.mxu0 %v135
    %v213 = vpop.f32.mrf.mxu0
    %v214 = vadd.f32 %v154, %v213
    %v215 = vpop.f32.mrf.mxu0
    %v216 = vadd.f32 %v154, %v215
    %217 = vdwg.mxu0
    %v218 = vmax.f32 %v214, 0.0
    %v219 = vmax.f32 %v216, 0.0
    %v220 = vpack.c.bf16 %v219, %v218
    %v221 = vld [vmem:[#allocation7] sm:$0xf]
    %v222 = vld [vmem:[#allocation7 + $0x4] sm:$0xf]
    %v223 = vld [vmem:[#allocation7 + $0x8] sm:$0xf]
    %v224 = vld [vmem:[#allocation7 + $0xc] sm:$0xf]
    %v225 = vld [vmem:[#allocation7 + $0x10] sm:$0xf]
    %v226 = vld [vmem:[#allocation7 + $0x14] sm:$0xf]
    %v227 = vld [vmem:[#allocation7 + $0x18] sm:$0xf]
    %v228 = vld [vmem:[#allocation7 + $0x1c] sm:$0xf]
    %v229 = vld [vmem:[#allocation7 + $0x20] sm:$0xf]
    %v230 = vld [vmem:[#allocation7 + $0x24] sm:$0xf]
    %v231 = vld [vmem:[#allocation7 + $0x28] sm:$0xf]
    %v232 = vld [vmem:[#allocation7 + $0x2c] sm:$0xf]
    %v233 = vld [vmem:[#allocation7 + $0x30] sm:$0xf]
    %v234 = vld [vmem:[#allocation7 + $0x34] sm:$0xf]
    %v235 = vld [vmem:[#allocation7 + $0x38] sm:$0xf]
    %v236 = vld [vmem:[#allocation7 + $0x3c] sm:$0xf]
    %v237 = vld [vmem:[%s6] sm:$0x1]
    %v239 = vperm.slane %v237, 0
    %v257 = vunpack.c.l.b16 %v221
    %v258 = vunpack.c.l.b16 %v222
    %v259 = vunpack.c.l.b16 %v223
    %v260 = vunpack.c.l.b16 %v224
    %v261 = vunpack.c.l.b16 %v225
    %v262 = vunpack.c.l.b16 %v226
    %v263 = vunpack.c.l.b16 %v227
    %v264 = vunpack.c.l.b16 %v228
    %v265 = vunpack.c.l.b16 %v229
    %v266 = vunpack.c.l.b16 %v230
    %v267 = vunpack.c.l.b16 %v231
    %v268 = vunpack.c.l.b16 %v232
    %v269 = vunpack.c.l.b16 %v233
    %v270 = vunpack.c.l.b16 %v234
    %v271 = vunpack.c.l.b16 %v235
    %v272 = vunpack.c.l.b16 %v236
    %v273 = vpack.c.b16 %v258, %v257
    %v274 = vpack.c.b16 %v260, %v259
    %v275 = vpack.c.b16 %v262, %v261
    %v276 = vpack.c.b16 %v264, %v263
    %v277 = vpack.c.b16 %v266, %v265
    %v278 = vpack.c.b16 %v268, %v267
    %v279 = vpack.c.b16 %v270, %v269
    %v280 = vpack.c.b16 %v272, %v271
    %289 = vmatpush.bf16.msra.mxu0 %v280
    %290 = vmatpush.bf16.msra.mxu0 %v279
    %291 = vmatpush.bf16.msra.mxu0 %v278
    %292 = vmatpush.bf16.msra.mxu0 %v277
    %293 = vmatpush.bf16.msra.mxu0 %v276
    %294 = vmatpush.bf16.msra.mxu0 %v275
    %295 = vmatpush.bf16.msra.mxu0 %v274
    %296 = vmatpush.bf16.msra.mxu0 %v273
    %297 = vmatmul.bf16.gmra.mxu0 %v220
    %v298 = vpop.f32.mrf.mxu0
    %v299 = vadd.f32 %v239, %v298
    %v300 = vpop.f32.mrf.mxu0
    %v301 = vadd.f32 %v239, %v300
    %302 = vdwg.mxu0
    %v303 = vadd.f32 %v299, %v74
    %v304 = vadd.f32 %v301, %v75
    %305 = vst [vmem:[#allocation8] sm:$0xff] %v303
    %306 = vst [vmem:[#allocation8 + $0x8] sm:$0xff] %v304
    // Predicated region
    $region42: #{tpu_custom_call.1} parent=1 // pred_check
      _
    $region43: #{tpu_custom_call.1} parent=1 // pred_check_branch
      %308 = sbr.rel (0) target = $region45
    $region44: #{tpu_custom_call.1} parent=1 // pred_region
      %310 = vsyncadd [#allocation4], 0
      %s311 = sshll.u32 [#allocation8], 4
      %s312 = int_to_ptr.vmem [resolvable:$true] %s311
      %s313 = sshll.u32 %s7, 4
      %s314 = int_to_ptr.hbm [resolvable:$true] %s313
      %319 = dma.vmem_to_hbm [thread:$0]  %s312, 256, %s314, [#allocation4], 128, 128, 8
    $region45: #{tpu_custom_call.1} parent=1 // pred_fallthru
      _
    // Predicated region
    $region46: #{tpu_custom_call.1} parent=1 // pred_check
      _
    $region47: #{tpu_custom_call.1} parent=1 // pred_check_branch
      %321 = sbr.rel (0) target = $region49
    $region48: #{tpu_custom_call.1} parent=1 // pred_region
      %323 = dma.done [#allocation4], 256
    $region49: #{tpu_custom_call.1} parent=1 // pred_fallthru
      _
    %324 = vsyncpa [#allocation3], 1
    %325 = vsyncpa [#allocation6], 1
    %326 = vsyncpa [#allocation4], 1

// kernel: tpu_custom_call.1
$region0: #{tpu_custom_call.1}
  #allocation0 [shape = 'u32[]', space=smem, size = 0x4, offset = 0x4, fixed_abs, tag = 'smem constant byte address 0x4 - core index']
  #allocation1 [shape = 'u32[72,128]{1,0:T(1,128)}', space=vmem, size = 0x9000, scoped, tag = 'internal scratch']
  %s0 = inlined_call_operand.hbm [shape: f32[16,128], index: 0, kind: input, shape index: {}, may-alias: {0,7}]
  %s1 = inlined_call_operand.vmem [shape: f32[1,128], index: 1, kind: input, shape index: {}]
  %s2 = inlined_call_operand.vmem [shape: f32[1,128], index: 2, kind: input, shape index: {}]
  %s3 = inlined_call_operand.hbm [shape: bf16[128,128], index: 3, kind: input, shape index: {}]
  %s4 = inlined_call_operand.vmem [shape: f32[1,128], index: 4, kind: input, shape index: {}]
  %s5 = inlined_call_operand.hbm [shape: bf16[128,128], index: 5, kind: input, shape index: {}]
  %s6 = inlined_call_operand.vmem [shape: f32[1,128], index: 6, kind: input, shape index: {}]
  %s7 = inlined_call_operand.hbm [shape: f32[16,128], index: 7, kind: output, shape index: {}, may-alias: {0,7}]
  %s8 = sld [smem:[#allocation0]]
  $region50: #{tpu_custom_call.1} parent=0
    _
  %s10 = ssub.s32 1, %s8
  %s11 = scalar_select 0, %s10, %s8
  $region1: #{tpu_custom_call.1} parent=0
    #allocation2 [shape = 'u8[8192]{0}', space=vmem, size = 0x2000, scoped, tag = 'input window, operand 0, single buffered']
    #allocation3 [shape = 's32[1]{0}', space=sflag, size = 0x4, scoped, tag = 'scoped memory for tpu_custom_call.1']
    #allocation4 [shape = 's32[1]{0}', space=sflag, size = 0x4, scoped, tag = 'scoped memory for tpu_custom_call.1']
    #allocation5 [shape = 'u8[32768]{0}', space=vmem, size = 0x8000, scoped, tag = 'input window, operand 3, single buffered']
    #allocation6 [shape = 's32[1]{0}', space=sflag, size = 0x4, scoped, tag = 'scoped memory for tpu_custom_call.1']
    #allocation7 [shape = 'u8[32768]{0}', space=vmem, size = 0x8000, scoped, tag = 'input window, operand 5, single buffered']
    #allocation8 [shape = 'u8[8192]{0}', space=vmem, size = 0x2000, scoped, tag = 'output window, operand 0, single buffered']
    %12 = vsyncpa [#allocation3], 0
    %13 = vsyncpa [#allocation6], 0
    %14 = vsyncpa [#allocation4], 0
    // Predicated region
    $region2: #{tpu_custom_call.1} parent=1 // pred_check
      _
    $region3: #{tpu_custom_call.1} parent=1 // pred_check_branch
      %16 = sbr.rel (0) target = $region5
    $region4: #{tpu_custom_call.1} parent=1 // pred_region
      %18 = vsyncadd [#allocation3], 0
      %s19 = sshll.u32 %s0, 4
      %s20 = int_to_ptr.hbm [resolvable:$true] %s19
      %s21 = sshll.u32 [#allocation2], 4
      %s22 = int_to_ptr.vmem [resolvable:$true] %s21
      %27 = dma.hbm_to_vmem [thread:$0]  %s20, 256, %s22, [#allocation3], 128, 128, 8
    $region5: #{tpu_custom_call.1} parent=1 // pred_fallthru
      _
    // Predicated region
    $region6: #{tpu_custom_call.1} parent=1 // pred_check
      _
    $region7: #{tpu_custom_call.1} parent=1 // pred_check_branch
      %29 = sbr.rel (0) target = $region9
    $region8: #{tpu_custom_call.1} parent=1 // pred_region
      _
    $region9: #{tpu_custom_call.1} parent=1 // pred_fallthru
      _
    // Predicated region
    $region10: #{tpu_custom_call.1} parent=1 // pred_check
      _
    $region11: #{tpu_custom_call.1} parent=1 // pred_check_branch
      %31 = sbr.rel (0) target = $region13
    $region12: #{tpu_custom_call.1} parent=1 // pred_region
      _
    $region13: #{tpu_custom_call.1} parent=1 // pred_fallthru
      _
    // Predicated region
    $region14: #{tpu_custom_call.1} parent=1 // pred_check
      _
    $region15: #{tpu_custom_call.1} parent=1 // pred_check_branch
      %33 = sbr.rel (0) target = $region17
    $region16: #{tpu_custom_call.1} parent=1 // pred_region
      %35 = vsyncadd [#allocation6], 0
      %s36 = sshll.u32 %s3, 4
      %s37 = int_to_ptr.hbm [resolvable:$true] %s36
      %s38 = sshll.u32 [#allocation5], 4
      %s39 = int_to_ptr.vmem [resolvable:$true] %s38
      %44 = dma.hbm_to_vmem [thread:$0]  %s37, 1024, %s39, [#allocation6], 64, 64, 4
    $region17: #{tpu_custom_call.1} parent=1 // pred_fallthru
      _
    // Predicated region
    $region18: #{tpu_custom_call.1} parent=1 // pred_check
      _
    $region19: #{tpu_custom_call.1} parent=1 // pred_check_branch
      %46 = sbr.rel (0) target = $region21
    $region20: #{tpu_custom_call.1} parent=1 // pred_region
      _
    $region21: #{tpu_custom_call.1} parent=1 // pred_fallthru
      _
    // Predicated region
    $region22: #{tpu_custom_call.1} parent=1 // pred_check
      _
    $region23: #{tpu_custom_call.1} parent=1 // pred_check_branch
      %48 = sbr.rel (0) target = $region25
    $region24: #{tpu_custom_call.1} parent=1 // pred_region
      %50 = vsyncadd [#allocation6], 0
      %s51 = sshll.u32 %s5, 4
      %s52 = int_to_ptr.hbm [resolvable:$true] %s51
      %s53 = sshll.u32 [#allocation7], 4
      %s54 = int_to_ptr.vmem [resolvable:$true] %s53
      %59 = dma.hbm_to_vmem [thread:$0]  %s52, 1024, %s54, [#allocation6], 64, 64, 4
    $region25: #{tpu_custom_call.1} parent=1 // pred_fallthru
      _
    // Predicated region
    $region26: #{tpu_custom_call.1} parent=1 // pred_check
      _
    $region27: #{tpu_custom_call.1} parent=1 // pred_check_branch
      %61 = sbr.rel (0) target = $region29
    $region28: #{tpu_custom_call.1} parent=1 // pred_region
      _
    $region29: #{tpu_custom_call.1} parent=1 // pred_fallthru
      _
    // Predicated region
    $region30: #{tpu_custom_call.1} parent=1 // pred_check
      _
    $region31: #{tpu_custom_call.1} parent=1 // pred_check_branch
      %63 = sbr.rel (0) target = $region33
    $region32: #{tpu_custom_call.1} parent=1 // pred_region
      %65 = dma.done [#allocation3], 256
    $region33: #{tpu_custom_call.1} parent=1 // pred_fallthru
      _
    // Predicated region
    $region34: #{tpu_custom_call.1} parent=1 // pred_check
      _
    $region35: #{tpu_custom_call.1} parent=1 // pred_check_branch
      %67 = sbr.rel (0) target = $region37
    $region36: #{tpu_custom_call.1} parent=1 // pred_region
      %69 = dma.done [#allocation6], 1024
    $region37: #{tpu_custom_call.1} parent=1 // pred_fallthru
      _
    // Predicated region
    $region38: #{tpu_custom_call.1} parent=1 // pred_check
      _
    $region39: #{tpu_custom_call.1} parent=1 // pred_check_branch
      %71 = sbr.rel (0) target = $region41
    $region40: #{tpu_custom_call.1} parent=1 // pred_region
      %73 = dma.done [#allocation6], 1024
    $region41: #{tpu_custom_call.1} parent=1 // pred_fallthru
      _
    %v74 = vld [vmem:[#allocation2] sm:$0xff]
    %v75 = vld [vmem:[#allocation2 + $0x8] sm:$0xff]
    %76 = vadd.xlane.f32.xlu0 %v74
    %v77 = vpop.xlane.xlu0 %76
    %78 = vadd.xlane.f32.xlu0 %v75
    %v79 = vpop.xlane.xlu0 %78
    %v80 = vmul.f32 %v77, 0.03125
    %v81 = vmul.f32 %v79, 0.03125
    %v82 = vlaneseq
    %v83 = vand.u32 %v82, 127
    %vm84 = vcmp.lt.s32.totalorder %v83, 32
    %v85 = vsub.f32 %v74, %v80
    %v86 = vsub.f32 %v75, %v81
    %v87 = vsel %vm84, 1, 0
    %vm88 = vcmp.eq.s32.totalorder %v87, 1
    %v89 = vsel %vm88, %v85, 0.0
    %v90 = vsel %vm88, %v86, 0.0
    %v91 = vmul.f32 %v89, %v89
    %v92 = vmul.f32 %v90, %v90
    %93 = vadd.xlane.f32.xlu0 %v91
    %v94 = vpop.xlane.xlu0 %93
    %95 = vadd.xlane.f32.xlu0 %v92
    %v96 = vpop.xlane.xlu0 %95
    %v97 = vmul.f32 %v94, 0.03125
    %v98 = vmul.f32 %v96, 0.03125
    %v99 = vadd.f32 %v97, 1e-05
    %v100 = vadd.f32 %v98, 1e-05
    %v101 = vrsqrt.pop %v99
    %v102 = vmul.f32 %v101, %v99
    %v103 = vmul.f32 %v102, %v101
    %v104 = vmul.f32 0.5, %v103
    %v105 = vsub.f32 1.5, %v104
    %v106 = vmul.f32 %v101, %v105
    %vm107 = vweird.f32 %v99
    %vm108 = vweird.f32 %v101
    %vm109 = vmor %vm107, %vm108
    %v110 = vsel %vm109, %v101, %v106
    %v111 = vrsqrt.pop %v100
    %v112 = vmul.f32 %v111, %v100
    %v113 = vmul.f32 %v112, %v111
    %v114 = vmul.f32 0.5, %v113
    %v115 = vsub.f32 1.5, %v114
    %v116 = vmul.f32 %v111, %v115
    %vm117 = vweird.f32 %v100
    %vm118 = vweird.f32 %v111
    %vm119 = vmor %vm117, %vm118
    %v120 = vsel %vm119, %v111, %v116
    %v121 = vmul.f32 %v89, %v110
    %v122 = vmul.f32 %v90, %v120
    %v123 = vld [vmem:[%s1] sm:$0x1]
    %v125 = vperm.slane %v123, 0
    %v127 = vmul.f32 %v121, %v125
    %v128 = vmul.f32 %v122, %v125
    %v129 = vld [vmem:[%s2] sm:$0x1]
    %v131 = vperm.slane %v129, 0
    %v133 = vadd.f32 %v127, %v131
    %v134 = vadd.f32 %v128, %v131
    %v135 = vpack.c.bf16 %v134, %v133
    %v136 = vld [vmem:[#allocation5] sm:$0xf]
    %v137 = vld [vmem:[#allocation5 + $0x4] sm:$0xf]
    %v138 = vld [vmem:[#allocation5 + $0x8] sm:$0xf]
    %v139 = vld [vmem:[#allocation5 + $0xc] sm:$0xf]
    %v140 = vld [vmem:[#allocation5 + $0x10] sm:$0xf]
    %v141 = vld [vmem:[#allocation5 + $0x14] sm:$0xf]
    %v142 = vld [vmem:[#allocation5 + $0x18] sm:$0xf]
    %v143 = vld [vmem:[#allocation5 + $0x1c] sm:$0xf]
    %v144 = vld [vmem:[#allocation5 + $0x20] sm:$0xf]
    %v145 = vld [vmem:[#allocation5 + $0x24] sm:$0xf]
    %v146 = vld [vmem:[#allocation5 + $0x28] sm:$0xf]
    %v147 = vld [vmem:[#allocation5 + $0x2c] sm:$0xf]
    %v148 = vld [vmem:[#allocation5 + $0x30] sm:$0xf]
    %v149 = vld [vmem:[#allocation5 + $0x34] sm:$0xf]
    %v150 = vld [vmem:[#allocation5 + $0x38] sm:$0xf]
    %v151 = vld [vmem:[#allocation5 + $0x3c] sm:$0xf]
    %v152 = vld [vmem:[%s4] sm:$0x1]
    %v154 = vperm.slane %v152, 0
    %v172 = vunpack.c.l.b16 %v136
    %v173 = vunpack.c.l.b16 %v137
    %v174 = vunpack.c.l.b16 %v138
    %v175 = vunpack.c.l.b16 %v139
    %v176 = vunpack.c.l.b16 %v140
    %v177 = vunpack.c.l.b16 %v141
    %v178 = vunpack.c.l.b16 %v142
    %v179 = vunpack.c.l.b16 %v143
    %v180 = vunpack.c.l.b16 %v144
    %v181 = vunpack.c.l.b16 %v145
    %v182 = vunpack.c.l.b16 %v146
    %v183 = vunpack.c.l.b16 %v147
    %v184 = vunpack.c.l.b16 %v148
    %v185 = vunpack.c.l.b16 %v149
    %v186 = vunpack.c.l.b16 %v150
    %v187 = vunpack.c.l.b16 %v151
    %v188 = vpack.c.b16 %v173, %v172
    %v189 = vpack.c.b16 %v175, %v174
    %v190 = vpack.c.b16 %v177, %v176
    %v191 = vpack.c.b16 %v179, %v178
    %v192 = vpack.c.b16 %v181, %v180
    %v193 = vpack.c.b16 %v183, %v182
    %v194 = vpack.c.b16 %v185, %v184
    %v195 = vpack.c.b16 %v187, %v186
    %204 = vmatpush.bf16.msra.mxu0 %v195
    %205 = vmatpush.bf16.msra.mxu0 %v194
    %206 = vmatpush.bf16.msra.mxu0 %v193
    %207 = vmatpush.bf16.msra.mxu0 %v192
    %208 = vmatpush.bf16.msra.mxu0 %v191
    %209 = vmatpush.bf16.msra.mxu0 %v190
    %210 = vmatpush.bf16.msra.mxu0 %v189
    %211 = vmatpush.bf16.msra.mxu0 %v188
    %212 = vmatmul.bf16.gmra.mxu0 %v135
    %v213 = vpop.f32.mrf.mxu0
    %v214 = vadd.f32 %v154, %v213
    %v215 = vpop.f32.mrf.mxu0
    %v216 = vadd.f32 %v154, %v215
    %217 = vdwg.mxu0
    %v218 = vmax.f32 %v214, 0.0
    %v219 = vmax.f32 %v216, 0.0
    %v220 = vpack.c.bf16 %v219, %v218
    %v221 = vld [vmem:[#allocation7] sm:$0xf]
    %v222 = vld [vmem:[#allocation7 + $0x4] sm:$0xf]
    %v223 = vld [vmem:[#allocation7 + $0x8] sm:$0xf]
    %v224 = vld [vmem:[#allocation7 + $0xc] sm:$0xf]
    %v225 = vld [vmem:[#allocation7 + $0x10] sm:$0xf]
    %v226 = vld [vmem:[#allocation7 + $0x14] sm:$0xf]
    %v227 = vld [vmem:[#allocation7 + $0x18] sm:$0xf]
    %v228 = vld [vmem:[#allocation7 + $0x1c] sm:$0xf]
    %v229 = vld [vmem:[#allocation7 + $0x20] sm:$0xf]
    %v230 = vld [vmem:[#allocation7 + $0x24] sm:$0xf]
    %v231 = vld [vmem:[#allocation7 + $0x28] sm:$0xf]
    %v232 = vld [vmem:[#allocation7 + $0x2c] sm:$0xf]
    %v233 = vld [vmem:[#allocation7 + $0x30] sm:$0xf]
    %v234 = vld [vmem:[#allocation7 + $0x34] sm:$0xf]
    %v235 = vld [vmem:[#allocation7 + $0x38] sm:$0xf]
    %v236 = vld [vmem:[#allocation7 + $0x3c] sm:$0xf]
    %v237 = vld [vmem:[%s6] sm:$0x1]
    %v239 = vperm.slane %v237, 0
    %v257 = vunpack.c.l.b16 %v221
    %v258 = vunpack.c.l.b16 %v222
    %v259 = vunpack.c.l.b16 %v223
    %v260 = vunpack.c.l.b16 %v224
    %v261 = vunpack.c.l.b16 %v225
    %v262 = vunpack.c.l.b16 %v226
    %v263 = vunpack.c.l.b16 %v227
    %v264 = vunpack.c.l.b16 %v228
    %v265 = vunpack.c.l.b16 %v229
    %v266 = vunpack.c.l.b16 %v230
    %v267 = vunpack.c.l.b16 %v231
    %v268 = vunpack.c.l.b16 %v232
    %v269 = vunpack.c.l.b16 %v233
    %v270 = vunpack.c.l.b16 %v234
    %v271 = vunpack.c.l.b16 %v235
    %v272 = vunpack.c.l.b16 %v236
    %v273 = vpack.c.b16 %v258, %v257
    %v274 = vpack.c.b16 %v260, %v259
    %v275 = vpack.c.b16 %v262, %v261
    %v276 = vpack.c.b16 %v264, %v263
    %v277 = vpack.c.b16 %v266, %v265
    %v278 = vpack.c.b16 %v268, %v267
    %v279 = vpack.c.b16 %v270, %v269
    %v280 = vpack.c.b16 %v272, %v271
    %289 = vmatpush.bf16.msra.mxu0 %v280
    %290 = vmatpush.bf16.msra.mxu0 %v279
    %291 = vmatpush.bf16.msra.mxu0 %v278
    %292 = vmatpush.bf16.msra.mxu0 %v277
    %293 = vmatpush.bf16.msra.mxu0 %v276
    %294 = vmatpush.bf16.msra.mxu0 %v275
    %295 = vmatpush.bf16.msra.mxu0 %v274
    %296 = vmatpush.bf16.msra.mxu0 %v273
    %297 = vmatmul.bf16.gmra.mxu0 %v220
    %v298 = vpop.f32.mrf.mxu0
    %v299 = vadd.f32 %v239, %v298
    %v300 = vpop.f32.mrf.mxu0
    %v301 = vadd.f32 %v239, %v300
    %302 = vdwg.mxu0
    %v303 = vadd.f32 %v299, %v74
    %v304 = vadd.f32 %v301, %v75
    %305 = vst [vmem:[#allocation8] sm:$0xff] %v303
    %306 = vst [vmem:[#allocation8 + $0x8] sm:$0xff] %v304
    // Predicated region
    $region42: #{tpu_custom_call.1} parent=1 // pred_check
      _
    $region43: #{tpu_custom_call.1} parent=1 // pred_check_branch
      %308 = sbr.rel (0) target = $region45
    $region44: #{tpu_custom_call.1} parent=1 // pred_region
      %310 = vsyncadd [#allocation4], 0
      %s311 = sshll.u32 [#allocation8], 4
      %s312 = int_to_ptr.vmem [resolvable:$true] %s311
      %s313 = sshll.u32 %s7, 4
      %s314 = int_to_ptr.hbm [resolvable:$true] %s313
      %319 = dma.vmem_to_hbm [thread:$0]  %s312, 256, %s314, [#allocation4], 128, 128, 8
    $region45: #{tpu_custom_call.1} parent=1 // pred_fallthru
      _
    // Predicated region
    $region46: #{tpu_custom_call.1} parent=1 // pred_check
      _
    $region47: #{tpu_custom_call.1} parent=1 // pred_check_branch
      %321 = sbr.rel (0) target = $region49
    $region48: #{tpu_custom_call.1} parent=1 // pred_region
      %323 = dma.done [#allocation4], 256
    $region49: #{tpu_custom_call.1} parent=1 // pred_fallthru
      _
    %324 = vsyncpa [#allocation3], 1
    %325 = vsyncpa [#allocation6], 1
    %326 = vsyncpa [#allocation4], 1

</llo_original>
